<compile_context>
chip_gen: v7x
topology: tpu7x:2x2x1
jax: 0.10.0
libtpu: 0.0.40
codegen_flags: <defaults>
</compile_context>

<pallas_src>
import jax
import jax.numpy as jnp
from jax.experimental import pallas as pl
from jax.experimental.pallas import tpu as pltpu


def _cdiv(a, b):
    return (a + b - 1) // b


def _round_up(x, m):
    return _cdiv(x, m) * m


def _vmem_capacity_bytes():
    try:
        return int(pltpu.get_tpu_info().vmem_capacity_bytes)
    except Exception:
        return 64 << 20          # conservative fallback: v7x per-TensorCore VMEM


def _vq_kernel(x_ref, et_ref, bias_ref, idx_ref, max_sc, idx_sc):
    # x_ref:    (TILE_N, D)        input rows (resident across the K axis)
    # et_ref:   (D, TILE_K)        pre-transposed codebook tile
    # bias_ref: (1, TILE_K) f32    0.5*||e||^2  (+inf on padded codes)
    # idx_ref:  (TILE_N//128, 128) int32 nearest-code indices (lane-dense)
    # max_sc:   (TILE_N, 1) f32    running max score         (VMEM scratch)
    # idx_sc:   (TILE_N, 1) i32    running best code index   (VMEM scratch)
    kk = pl.program_id(1)
    tile_k = et_ref.shape[-1]

    @pl.when(kk == 0)
    def _init():
        max_sc[...] = jnp.full(max_sc.shape, -jnp.inf, max_sc.dtype)
        idx_sc[...] = jnp.zeros(idx_sc.shape, idx_sc.dtype)

    x = x_ref[...]
    et = et_ref[...]
    if x.dtype != et.dtype:
        x = x.astype(et.dtype)
    # x @ embed.T on the MXU, f32 accumulation (codebook already transposed).
    xe = jnp.dot(x, et, preferred_element_type=jnp.float32)          # (TILE_N, TILE_K)
    # argmax(xe - 0.5*||e||^2) == argmax(-(||x||^2 - 2 xe + ||e||^2)).
    # Padded codes have bias=+inf -> score=-inf, never selected.
    score = xe - bias_ref[...]

    local_max = jnp.max(score, axis=-1, keepdims=True)                # (TILE_N, 1)
    local_idx = (jnp.argmax(score, axis=-1).astype(jnp.int32)
                 + kk * tile_k)[:, None]                              # (TILE_N, 1)

    # strict ">" keeps the earliest max across K tiles (first-max tie-breaking,
    # matching torch.argmax within each tile via jnp.argmax).
    better = local_max > max_sc[...]
    idx_sc[...] = jnp.where(better, local_idx, idx_sc[...])
    max_sc[...] = jnp.where(better, local_max, max_sc[...])

    @pl.when(kk == pl.num_programs(1) - 1)
    def _finalize():
        # lane-dense int32 writeback: (TILE_N, 1) -> (TILE_N // 128, 128)
        idx_ref[...] = idx_sc[...].reshape(idx_ref.shape)


def _vmem_limit_bytes(tile_n, tile_k, d, x_itemsize, e_itemsize, vmem_cap):
    need = 2 * tile_n * d * x_itemsize           # x row tile (double-buffered)
    need += 2 * d * tile_k * e_itemsize          # codebook tile (double-buffered)
    need += 2 * tile_k * 4                       # bias tile
    need += 2 * tile_n * 4                       # int32 index output tile
    need += 2 * tile_n * 128 * 4                 # (TILE_N, 1) scratch, lane-padded
    need += 3 * tile_n * tile_k * 4              # f32 score tile + argmax/relayout temps
    need = int(need * 1.25) + (4 << 20)          # headroom for compiler scratch
    return int(min(max(need, 16 << 20), int(0.85 * min(vmem_cap, 128 << 20))))


def codebook_forward(x, embed, node_mask=None, *, tile_n=None, tile_k=None,
                     use_bf16_matmul=False):
    """Eval-mode forward of Codebook. Returns (quantize, embed_ind, perplexity)."""
    shape = x.shape
    d = shape[-1]
    flatten = x.reshape(-1, d)
    n = flatten.shape[0]
    k = embed.shape[0]
    vmem_cap = _vmem_capacity_bytes()

    # ---- codebook (K) tiling: pad K to a lane multiple, bound the score tile.
    k128 = _round_up(k, 128)
    if tile_k is None:
        tile_k_cap = 2048 if vmem_cap >= (96 << 20) else 1024
        n_kb = _cdiv(k128, tile_k_cap)
        tile_k = _round_up(_cdiv(k128, n_kb), 128)
    else:
        tile_k = _round_up(tile_k, 128)
    num_k_tiles = _cdiv(k128, tile_k)
    k_pad = num_k_tiles * tile_k

    # ---- row (N) tiling: single tile for small N, otherwise 1024/2048-row tiles.
    if tile_n is None:
        if n <= 1024:
            tile_n = _round_up(max(n, 8), 128)   # single tile (block == full array)
        else:
            tile_n = 1024
            if vmem_cap >= (96 << 20) and d <= 128 and tile_k <= 2048:
                tile_n = 2048                    # v5e / v6e: bigger row tiles (128 MiB VMEM)
    if n > tile_n:
        # multi-tile: lane-dense idx blocks need tile_n % 1024 == 0
        tile_n = _round_up(tile_n, 1024)
    num_n_tiles = _cdiv(n, tile_n)
    n_pad = num_n_tiles * tile_n

    # ---- hoisted preprocessing (once per call; tiled across grid steps).
    mm_dtype = jnp.bfloat16 if use_bf16_matmul else flatten.dtype
    embed_f32 = embed.astype(jnp.float32)
    e_half_sq = 0.5 * jnp.sum(embed_f32 * embed_f32, axis=1)                # (K,)
    bias = jnp.full((1, k_pad), jnp.inf, jnp.float32).at[0, :k].set(e_half_sq)
    embed_t = jnp.zeros((d, k_pad), mm_dtype).at[:, :k].set(embed.T.astype(mm_dtype))

    if n_pad != n:
        # TODO(synk): handle the ragged last row tile with a masked tail kernel
        # instead of materializing a zero-padded copy of the input.
        flatten_p = jnp.zeros((n_pad, d), flatten.dtype).at[:n].set(flatten)
    else:
        flatten_p = flatten

    compiler_params = pltpu.CompilerParams(
        dimension_semantics=("parallel", "arbitrary"),
        vmem_limit_bytes=_vmem_limit_bytes(
            tile_n, tile_k, d, flatten.dtype.itemsize,
            jnp.dtype(mm_dtype).itemsize, vmem_cap),
    )

    idx2d = pl.pallas_call(
        _vq_kernel,
        out_shape=jax.ShapeDtypeStruct((n_pad // 128, 128), jnp.int32),
        grid_spec=pltpu.PrefetchScalarGridSpec(
            num_scalar_prefetch=0,
            grid=(num_n_tiles, num_k_tiles),
            in_specs=[
                pl.BlockSpec((tile_n, d), lambda i, kk: (i, 0)),    # x rows (resident over K)
                pl.BlockSpec((d, tile_k), lambda i, kk: (0, kk)),   # codebook tile
                pl.BlockSpec((1, tile_k), lambda i, kk: (0, kk)),   # 0.5*||e||^2 tile
            ],
            out_specs=pl.BlockSpec((tile_n // 128, 128), lambda i, kk: (i, 0)),
            scratch_shapes=[pltpu.VMEM((tile_n, 1), jnp.float32),   # running max score
                            pltpu.VMEM((tile_n, 1), jnp.int32)],    # running best index
        ),
        compiler_params=compiler_params,
    )(flatten_p, embed_t, bias)

    idx_flat = idx2d.reshape(-1)[:n]
    embed_ind = idx_flat.reshape(shape[:-1])

    # Embedding gather in the wrapper (for small D the in-kernel one-hot gather
    # is VPU-bound; a plain gather is cheaper and exact).
    quantize = jnp.take(embed, idx_flat, axis=0).astype(x.dtype).reshape(shape)

    # Perplexity via a K-length histogram (no (N, K) one-hot in HBM). Matches
    # mean(one_hot(ind) * node_mask, dim=0) of the PyTorch module.
    if node_mask is not None:
        w = node_mask.reshape(-1).astype(jnp.float32)
    else:
        w = jnp.ones((n,), jnp.float32)
    counts = jnp.zeros((k,), jnp.float32).at[idx_flat].add(w)
    avg_probs = counts / n
    perplexity = jnp.exp(-jnp.sum(avg_probs * jnp.log(avg_probs + 1e-10)))

    # TODO(synk): training-only EMA / manifold weighted-midpoint codebook update
    # (learnable_codebook=False && training) intentionally not implemented.
    return quantize, embed_ind, perplexity


if __name__ == "__main__":
    B, S, D, K = 2, 8, 32, 64   # batch, seq, dim, codebook_size

    key = jax.random.PRNGKey(0)
    kx, ke, k2 = jax.random.split(key, 3)
    x = jax.random.normal(kx, (B, S, D), dtype=jnp.float32)
    # Deterministic synthetic codebook (stands in for manifold.random(K, D)).
    embed = jax.random.normal(ke, (K, D), dtype=jnp.float32)
    node_mask = jnp.ones((B, S), dtype=jnp.float32)

    quantize, embed_ind, perplexity = codebook_forward(x, embed, node_mask)
    jax.block_until_ready((quantize, embed_ind, perplexity))

    # Pure-JAX reference of the original (full) distance formula.
    flat = x.reshape(-1, D)
    ref_dist = -(jnp.sum(flat ** 2, 1, keepdims=True)
                 - 2.0 * flat @ embed.T
                 + jnp.sum(embed ** 2, 1)[None, :])
    ref_ind = jnp.argmax(ref_dist, axis=-1).reshape(B, S)
    ref_q = embed[ref_ind]

    assert quantize.shape == (B, S, D) and quantize.dtype == x.dtype
    assert embed_ind.shape == (B, S)
    assert jnp.array_equal(embed_ind, ref_ind)
    assert jnp.allclose(quantize, ref_q, atol=1e-5, rtol=1e-5)

    onehot_ref = jax.nn.one_hot(ref_ind.reshape(-1), K) * node_mask.reshape(-1)[:, None]
    avg = jnp.mean(onehot_ref, axis=0)
    ref_ppl = jnp.exp(-jnp.sum(avg * jnp.log(avg + 1e-10)))
    assert jnp.allclose(perplexity, ref_ppl, atol=1e-4, rtol=1e-4)

    # Also exercise the multi-tile path: ragged N (padding), K not a lane multiple,
    # multiple N and K grid steps (running-argmax accumulator).
    N2, K2 = 1200, 200
    x2 = jax.random.normal(k2, (N2, D), dtype=jnp.float32)
    embed2 = jax.random.normal(jax.random.PRNGKey(1), (K2, D), dtype=jnp.float32)
    q2, ind2, ppl2 = codebook_forward(x2, embed2, None, tile_n=1024, tile_k=128)
    jax.block_until_ready((q2, ind2, ppl2))
    ref_d2 = -(jnp.sum(x2 ** 2, 1, keepdims=True) - 2.0 * x2 @ embed2.T
               + jnp.sum(embed2 ** 2, 1)[None, :])
    ref_i2 = jnp.argmax(ref_d2, axis=-1)
    assert jnp.array_equal(ind2, ref_i2)
    assert jnp.allclose(q2, embed2[ref_i2], atol=1e-5, rtol=1e-5)

    print("KERNEL_OK")
</pallas_src>

<mosaic_0001>
module attributes {stable_mosaic.version = 11 : i64} {
  func.func @_vq_kernel(%arg0: i32, %arg1: i32, %arg2: memref<128x32xf32, #tpu.memory_space<vmem>>, %arg3: memref<32x128xf32, #tpu.memory_space<vmem>>, %arg4: memref<1x128xf32, #tpu.memory_space<vmem>>, %arg5: memref<1x128xi32, #tpu.memory_space<vmem>>, %arg6: memref<128x1xf32, #tpu.memory_space<vmem>>, %arg7: memref<128x1xi32, #tpu.memory_space<vmem>>) attributes {dimension_semantics = [#tpu.dimension_semantics<parallel>, #tpu.dimension_semantics<arbitrary>], iteration_bounds = array<i64: 1, 1>, scalar_prefetch = 0 : i64, scratch_operands = 2 : i64, tpu.core_type = #tpu.core_type<tc>, window_params = [{transform_indices = @transform_0, window_bounds = array<i64: 128, 32>}, {transform_indices = @transform_1, window_bounds = array<i64: 32, 128>}, {transform_indices = @transform_2, window_bounds = array<i64: 1, 128>}, {transform_indices = @transform_3, window_bounds = array<i64: 1, 128>}]} {
    %c0_i32 = arith.constant 0 : i32
    %0 = arith.cmpi eq, %arg1, %c0_i32 : i32
    %1 = arith.extui %0 : i1 to i32
    %c0_i32_0 = arith.constant 0 : i32
    %2 = arith.cmpi ne, %1, %c0_i32_0 : i32
    scf.if %2 {
      %cst_19 = arith.constant 0xFF800000 : f32
      %27 = vector.broadcast %cst_19 : f32 to vector<128x1xf32>
      %c0_20 = arith.constant 0 : index
      %c0_21 = arith.constant 0 : index
      %28 = vector.load %arg6[%c0_20, %c0_21] : memref<128x1xf32, #tpu.memory_space<vmem>>, vector<128x1xf32>
      tpu.vector_store %arg6[%c0_20, %c0_21], %27 {strides = array<i32>} : memref<128x1xf32, #tpu.memory_space<vmem>>, vector<128x1xf32>,
      %c0_i32_22 = arith.constant 0 : i32
      %29 = vector.broadcast %c0_i32_22 : i32 to vector<128x1xi32>
      %c0_23 = arith.constant 0 : index
      %c0_24 = arith.constant 0 : index
      %30 = vector.load %arg7[%c0_23, %c0_24] : memref<128x1xi32, #tpu.memory_space<vmem>>, vector<128x1xi32>
      tpu.vector_store %arg7[%c0_23, %c0_24], %29 {strides = array<i32>} : memref<128x1xi32, #tpu.memory_space<vmem>>, vector<128x1xi32>,
    } else {
    }
    %c0 = arith.constant 0 : index
    %c0_1 = arith.constant 0 : index
    %3 = vector.load %arg2[%c0, %c0_1] : memref<128x32xf32, #tpu.memory_space<vmem>>, vector<128x32xf32>
    %c0_2 = arith.constant 0 : index
    %c0_3 = arith.constant 0 : index
    %4 = vector.load %arg3[%c0_2, %c0_3] : memref<32x128xf32, #tpu.memory_space<vmem>>, vector<32x128xf32>
    %cst = arith.constant dense<0.000000e+00> : vector<128x128xf32>
    %5 = tpu.matmul %3, %4, %cst {dimension_numbers = #tpu.dot_dimension_numbers<[1], [0], [0], [1], [0, 0, 1, 1], [], []>} : vector<128x32xf32>, vector<32x128xf32>, vector<128x128xf32> -> vector<128x128xf32>
    %c0_4 = arith.constant 0 : index
    %c0_5 = arith.constant 0 : index
    %6 = vector.load %arg4[%c0_4, %c0_5] : memref<1x128xf32, #tpu.memory_space<vmem>>, vector<1x128xf32>
    %7 = vector.broadcast %6 : vector<1x128xf32> to vector<128x128xf32>
    %8 = arith.subf %5, %7 : vector<128x128xf32>
    %cst_6 = arith.constant dense<0xFF800000> : vector<128xf32>
    %9 = vector.multi_reduction <maximumf>, %8, %cst_6 [1] : vector<128x128xf32> to vector<128xf32>
    %10 = vector.shape_cast %9 : vector<128xf32> to vector<128x1xf32>
    %11 = tpu.reduce_index %8 {axis = 1 : i32, kind = #tpu.reduction_kind<arg_max>} : vector<128x128xf32> -> vector<128xi32>
    %c128_i32 = arith.constant 128 : i32
    %12 = arith.muli %arg1, %c128_i32 : i32
    %13 = vector.broadcast %12 : i32 to vector<128xi32>
    %14 = arith.addi %11, %13 : vector<128xi32>
    %15 = vector.shape_cast %14 : vector<128xi32> to vector<128x1xi32>
    %c0_7 = arith.constant 0 : index
    %c0_8 = arith.constant 0 : index
    %16 = vector.load %arg6[%c0_7, %c0_8] : memref<128x1xf32, #tpu.memory_space<vmem>>, vector<128x1xf32>
    %17 = arith.cmpf ogt, %10, %16 : vector<128x1xf32>
    %c0_9 = arith.constant 0 : index
    %c0_10 = arith.constant 0 : index
    %18 = vector.load %arg7[%c0_9, %c0_10] : memref<128x1xi32, #tpu.memory_space<vmem>>, vector<128x1xi32>
    %19 = arith.select %17, %15, %18 : vector<128x1xi1>, vector<128x1xi32>
    %c0_11 = arith.constant 0 : index
    %c0_12 = arith.constant 0 : index
    %20 = vector.load %arg7[%c0_11, %c0_12] : memref<128x1xi32, #tpu.memory_space<vmem>>, vector<128x1xi32>
    tpu.vector_store %arg7[%c0_11, %c0_12], %19 {strides = array<i32>} : memref<128x1xi32, #tpu.memory_space<vmem>>, vector<128x1xi32>,
    %c0_13 = arith.constant 0 : index
    %c0_14 = arith.constant 0 : index
    %21 = vector.load %arg6[%c0_13, %c0_14] : memref<128x1xf32, #tpu.memory_space<vmem>>, vector<128x1xf32>
    %22 = arith.select %17, %10, %21 : vector<128x1xi1>, vector<128x1xf32>
    %c0_15 = arith.constant 0 : index
    %c0_16 = arith.constant 0 : index
    %23 = vector.load %arg6[%c0_15, %c0_16] : memref<128x1xf32, #tpu.memory_space<vmem>>, vector<128x1xf32>
    tpu.vector_store %arg6[%c0_15, %c0_16], %22 {strides = array<i32>} : memref<128x1xf32, #tpu.memory_space<vmem>>, vector<128x1xf32>,
    %c0_i32_17 = arith.constant 0 : i32
    %24 = arith.cmpi eq, %arg1, %c0_i32_17 : i32
    %25 = arith.extui %24 : i1 to i32
    %c0_i32_18 = arith.constant 0 : i32
    %26 = arith.cmpi ne, %25, %c0_i32_18 : i32
    scf.if %26 {
      %c0_19 = arith.constant 0 : index
      %c0_20 = arith.constant 0 : index
      %27 = vector.load %arg7[%c0_19, %c0_20] : memref<128x1xi32, #tpu.memory_space<vmem>>, vector<128x1xi32>
      %28 = vector.shape_cast %27 : vector<128x1xi32> to vector<1x128xi32>
      %c0_21 = arith.constant 0 : index
      %c0_22 = arith.constant 0 : index
      %29 = vector.load %arg5[%c0_21, %c0_22] : memref<1x128xi32, #tpu.memory_space<vmem>>, vector<1x128xi32>
      tpu.vector_store %arg5[%c0_21, %c0_22], %28 {strides = array<i32>} : memref<1x128xi32, #tpu.memory_space<vmem>>, vector<1x128xi32>,
    } else {
    }
    return
  }
  func.func @transform_0(%arg0: i32, %arg1: i32) -> (i32, i32) {
    %c0_i32 = arith.constant 0 : i32
    %c0_i32_0 = arith.constant 0 : i32
    return %arg0, %c0_i32 : i32, i32
  }
  func.func @transform_1(%arg0: i32, %arg1: i32) -> (i32, i32) {
    %c0_i32 = arith.constant 0 : i32
    %c0_i32_0 = arith.constant 0 : i32
    return %c0_i32, %arg1 : i32, i32
  }
  func.func @transform_2(%arg0: i32, %arg1: i32) -> (i32, i32) {
    %c0_i32 = arith.constant 0 : i32
    %c0_i32_0 = arith.constant 0 : i32
    return %c0_i32, %arg1 : i32, i32
  }
  func.func @transform_3(%arg0: i32, %arg1: i32) -> (i32, i32) {
    %c0_i32 = arith.constant 0 : i32
    %c0_i32_0 = arith.constant 0 : i32
    return %arg0, %c0_i32 : i32, i32
  }
}

</mosaic_0001>

<llo_original>
// kernel: tpu_custom_call.1
$region0: #{tpu_custom_call.1}
  #allocation0 [shape = 'u32[]', space=smem, size = 0x4, offset = 0x4, fixed_abs, tag = 'smem constant byte address 0x4 - core index']
  #allocation1 [shape = 'u32[144,128]{1,0:T(1,128)}', space=vmem, size = 0x12000, scoped, tag = 'internal scratch']
  #allocation2 [shape = 'f32[128,1]{1,0:T(8,128)}', space=vmem, size = 0x10000, scoped, tag = 'scratch operand']
  #allocation3 [shape = 's32[128,1]{1,0:T(8,128)}', space=vmem, size = 0x10000, scoped, tag = 'scratch operand']
  %s0 = inlined_call_operand.vmem [shape: f32[128,32], index: 0, kind: input, shape index: {}]
  %s1 = inlined_call_operand.vmem [shape: f32[32,128], index: 1, kind: input, shape index: {}]
  %s2 = inlined_call_operand.vmem [shape: f32[1,128], index: 2, kind: input, shape index: {}]
  %s3 = inlined_call_operand.hbm [shape: s32[1,128], index: 3, kind: output, shape index: {}]
  %s4 = sld [smem:[#allocation0]]
  $region30: #{tpu_custom_call.1} parent=0
    _
  %s6 = ssub.s32 1, %s4
  %s7 = scalar_select 0, %s6, %s4
  $region1: #{tpu_custom_call.1} parent=0
    #allocation4 [shape = 'u8[512]{0}', space=vmem, size = 0x400, scoped, tag = 'output window, operand 0, single buffered']
    #allocation5 [shape = 's32[1]{0}', space=sflag, size = 0x4, scoped, tag = 'scoped memory for tpu_custom_call.1']
    %8 = vsyncpa [#allocation5], 0
    // Predicated region
    $region2: #{tpu_custom_call.1} parent=1 // pred_check
      _
    $region3: #{tpu_custom_call.1} parent=1 // pred_check_branch
      %10 = sbr.rel (0) target = $region5
    $region4: #{tpu_custom_call.1} parent=1 // pred_region
      _
    $region5: #{tpu_custom_call.1} parent=1 // pred_fallthru
      _
    // Predicated region
    $region6: #{tpu_custom_call.1} parent=1 // pred_check
      _
    $region7: #{tpu_custom_call.1} parent=1 // pred_check_branch
      %12 = sbr.rel (0) target = $region9
    $region8: #{tpu_custom_call.1} parent=1 // pred_region
      _
    $region9: #{tpu_custom_call.1} parent=1 // pred_fallthru
      _
    // Predicated region
    $region10: #{tpu_custom_call.1} parent=1 // pred_check
      _
    $region11: #{tpu_custom_call.1} parent=1 // pred_check_branch
      %14 = sbr.rel (0) target = $region13
    $region12: #{tpu_custom_call.1} parent=1 // pred_region
      _
    $region13: #{tpu_custom_call.1} parent=1 // pred_fallthru
      _
    %p15 = scmp.eq.s32.totalorder 0, 0
    // Predicated region
    $region14: #{tpu_custom_call.1} parent=1 // pred_check
      %p16 = pneg %p15
    $region15: #{tpu_custom_call.1} parent=1 // pred_check_branch
      %18 = sbr.rel (%p16) target = $region17
    $region16: #{tpu_custom_call.1} parent=1 // pred_region
      %vm19 = vcmask 7168
      %20 = vst.msk [vmem:[#allocation2] sm:$0xff] %vm19, -inf
      %21 = vst.msk [vmem:[#allocation2 + $0x8] sm:$0xff] %vm19, -inf
      %22 = vst.msk [vmem:[#allocation2 + $0x10] sm:$0xff] %vm19, -inf
      %23 = vst.msk [vmem:[#allocation2 + $0x18] sm:$0xff] %vm19, -inf
      %24 = vst.msk [vmem:[#allocation2 + $0x20] sm:$0xff] %vm19, -inf
      %25 = vst.msk [vmem:[#allocation2 + $0x28] sm:$0xff] %vm19, -inf
      %26 = vst.msk [vmem:[#allocation2 + $0x30] sm:$0xff] %vm19, -inf
      %27 = vst.msk [vmem:[#allocation2 + $0x38] sm:$0xff] %vm19, -inf
      %28 = vst.msk [vmem:[#allocation2 + $0x40] sm:$0xff] %vm19, -inf
      %29 = vst.msk [vmem:[#allocation2 + $0x48] sm:$0xff] %vm19, -inf
      %30 = vst.msk [vmem:[#allocation2 + $0x50] sm:$0xff] %vm19, -inf
      %31 = vst.msk [vmem:[#allocation2 + $0x58] sm:$0xff] %vm19, -inf
      %32 = vst.msk [vmem:[#allocation2 + $0x60] sm:$0xff] %vm19, -inf
      %33 = vst.msk [vmem:[#allocation2 + $0x68] sm:$0xff] %vm19, -inf
      %34 = vst.msk [vmem:[#allocation2 + $0x70] sm:$0xff] %vm19, -inf
      %35 = vst.msk [vmem:[#allocation2 + $0x78] sm:$0xff] %vm19, -inf
      %36 = vst.msk [vmem:[#allocation3] sm:$0xff] %vm19, 0
      %37 = vst.msk [vmem:[#allocation3 + $0x8] sm:$0xff] %vm19, 0
      %38 = vst.msk [vmem:[#allocation3 + $0x10] sm:$0xff] %vm19, 0
      %39 = vst.msk [vmem:[#allocation3 + $0x18] sm:$0xff] %vm19, 0
      %40 = vst.msk [vmem:[#allocation3 + $0x20] sm:$0xff] %vm19, 0
      %41 = vst.msk [vmem:[#allocation3 + $0x28] sm:$0xff] %vm19, 0
      %42 = vst.msk [vmem:[#allocation3 + $0x30] sm:$0xff] %vm19, 0
      %43 = vst.msk [vmem:[#allocation3 + $0x38] sm:$0xff] %vm19, 0
      %44 = vst.msk [vmem:[#allocation3 + $0x40] sm:$0xff] %vm19, 0
      %45 = vst.msk [vmem:[#allocation3 + $0x48] sm:$0xff] %vm19, 0
      %46 = vst.msk [vmem:[#allocation3 + $0x50] sm:$0xff] %vm19, 0
      %47 = vst.msk [vmem:[#allocation3 + $0x58] sm:$0xff] %vm19, 0
      %48 = vst.msk [vmem:[#allocation3 + $0x60] sm:$0xff] %vm19, 0
      %49 = vst.msk [vmem:[#allocation3 + $0x68] sm:$0xff] %vm19, 0
      %50 = vst.msk [vmem:[#allocation3 + $0x70] sm:$0xff] %vm19, 0
      %51 = vst.msk [vmem:[#allocation3 + $0x78] sm:$0xff] %vm19, 0
    $region17: #{tpu_custom_call.1} parent=1 // pred_fallthru
      _
    %v52 = vld [vmem:[%s0] sm:$0xff]
    %v53 = vld [vmem:[%s0 + $0x8] sm:$0xff]
    %v54 = vld [vmem:[%s0 + $0x10] sm:$0xff]
    %v55 = vld [vmem:[%s0 + $0x18] sm:$0xff]
    %v56 = vld [vmem:[%s0 + $0x20] sm:$0xff]
    %v57 = vld [vmem:[%s0 + $0x28] sm:$0xff]
    %v58 = vld [vmem:[%s0 + $0x30] sm:$0xff]
    %v59 = vld [vmem:[%s0 + $0x38] sm:$0xff]
    %v60 = vld [vmem:[%s0 + $0x40] sm:$0xff]
    %v61 = vld [vmem:[%s0 + $0x48] sm:$0xff]
    %v62 = vld [vmem:[%s0 + $0x50] sm:$0xff]
    %v63 = vld [vmem:[%s0 + $0x58] sm:$0xff]
    %v64 = vld [vmem:[%s0 + $0x60] sm:$0xff]
    %v65 = vld [vmem:[%s0 + $0x68] sm:$0xff]
    %v66 = vld [vmem:[%s0 + $0x70] sm:$0xff]
    %v67 = vld [vmem:[%s0 + $0x78] sm:$0xff]
    %v68 = vld [vmem:[%s1] sm:$0xff]
    %v69 = vld [vmem:[%s1 + $0x8] sm:$0xff]
    %v70 = vld [vmem:[%s1 + $0x10] sm:$0xff]
    %v71 = vld [vmem:[%s1 + $0x18] sm:$0xff]
    %vm72 = vcmask 261120
    %v74 = vsel %vm72, %v52, 0
    %v77 = vsel %vm72, %v53, 0
    %v80 = vsel %vm72, %v54, 0
    %v83 = vsel %vm72, %v55, 0
    %v86 = vsel %vm72, %v56, 0
    %v89 = vsel %vm72, %v57, 0
    %v92 = vsel %vm72, %v58, 0
    %v95 = vsel %vm72, %v59, 0
    %v98 = vsel %vm72, %v60, 0
    %v101 = vsel %vm72, %v61, 0
    %v104 = vsel %vm72, %v62, 0
    %v107 = vsel %vm72, %v63, 0
    %v110 = vsel %vm72, %v64, 0
    %v113 = vsel %vm72, %v65, 0
    %v116 = vsel %vm72, %v66, 0
    %v119 = vsel %vm72, %v67, 0
    %121 = vmatprep.subr.mxu0 0.0
    %122 = vmatpush1.msra.mxu0 %v68
    %123 = vmatprep.subr.mxu0 0.0
    %124 = vmatpush1.msra.mxu0 %v69
    %125 = vmatprep.subr.mxu0 0.0
    %126 = vmatpush1.msra.mxu0 %v70
    %127 = vmatprep.subr.mxu0 0.0
    %128 = vmatpush1.msra.mxu0 %v71
    %129 = vmatprep.subr.mxu0 0.0
    %130 = vmatpush1.msra.mxu0 0.0
    %131 = vmatprep.subr.mxu0 0.0
    %132 = vmatpush1.msra.mxu0 0.0
    %133 = vmatprep.subr.mxu0 0.0
    %134 = vmatpush1.msra.mxu0 0.0
    %135 = vmatprep.subr.mxu0 0.0
    %136 = vmatpush1.msra.mxu0 0.0
    %137 = vmatprep.subr.mxu0 0.0
    %138 = vmatpush1.msra.mxu0 0.0
    %139 = vmatprep.subr.mxu0 0.0
    %140 = vmatpush1.msra.mxu0 0.0
    %141 = vmatprep.subr.mxu0 0.0
    %142 = vmatpush1.msra.mxu0 0.0
    %143 = vmatprep.subr.mxu0 0.0
    %144 = vmatpush1.msra.mxu0 0.0
    %145 = vmatprep.subr.mxu0 0.0
    %146 = vmatpush1.msra.mxu0 0.0
    %147 = vmatprep.subr.mxu0 0.0
    %148 = vmatpush1.msra.mxu0 0.0
    %149 = vmatprep.subr.mxu0 0.0
    %150 = vmatpush1.msra.mxu0 0.0
    %151 = vmatprep.subr.mxu0 0.0
    %152 = vmatpush1.msra.mxu0 0.0
    %153 = vmatprep.subr.mxu0 0.0
    %154 = vmatpush1.msra.mxu0 0.0
    %155 = vmatprep.subr.mxu0 0.0
    %156 = vmatpush1.msra.mxu0 0.0
    %157 = vmatprep.subr.mxu0 0.0
    %158 = vmatpush1.msra.mxu0 0.0
    %159 = vmatprep.subr.mxu0 0.0
    %160 = vmatpush1.msra.mxu0 0.0
    %161 = vmatprep.subr.mxu0 0.0
    %162 = vmatpush1.msra.mxu0 0.0
    %163 = vmatprep.subr.mxu0 0.0
    %164 = vmatpush1.msra.mxu0 0.0
    %165 = vmatprep.subr.mxu0 0.0
    %166 = vmatpush1.msra.mxu0 0.0
    %167 = vmatprep.subr.mxu0 0.0
    %168 = vmatpush1.msra.mxu0 0.0
    %169 = vmatprep.subr.mxu0 0.0
    %170 = vmatpush1.msra.mxu0 0.0
    %171 = vmatprep.subr.mxu0 0.0
    %172 = vmatpush1.msra.mxu0 0.0
    %173 = vmatprep.subr.mxu0 0.0
    %174 = vmatpush1.msra.mxu0 0.0
    %175 = vmatprep.subr.mxu0 0.0
    %176 = vmatpush1.msra.mxu0 0.0
    %177 = vmatprep.subr.mxu0 0.0
    %178 = vmatpush1.msra.mxu0 0.0
    %179 = vmatprep.subr.mxu0 0.0
    %180 = vmatpush1.msra.mxu0 0.0
    %181 = vmatprep.subr.mxu0 0.0
    %182 = vmatpush1.msra.mxu0 0.0
    %183 = vmatprep.subr.mxu0 0.0
    %184 = vmatpush1.msra.mxu0 0.0
    %185 = vmatprep.mubr.f32.mxu0 0.0
    %186 = vmatmul.mubr.f32.gmra.mrb[0].mxu0 %v74
    %v187 = vpop.f32.mrb[0].mxu0
    %v188 = vadd.f32 0.0, %v187
    %v189 = vpop.f32.mrb[0].mxu0
    %190 = vmatprep.mubr.f32.mxu0 0.0
    %191 = vmatmul.mubr.f32.gmra.mrb[0].mxu0 %v77
    %v192 = vpop.f32.mrb[0].mxu0
    %v193 = vadd.f32 0.0, %v192
    %v194 = vpop.f32.mrb[0].mxu0
    %195 = vmatprep.mubr.f32.mxu0 0.0
    %196 = vmatmul.mubr.f32.gmra.mrb[0].mxu0 %v80
    %v197 = vpop.f32.mrb[0].mxu0
    %v198 = vadd.f32 0.0, %v197
    %v199 = vpop.f32.mrb[0].mxu0
    %200 = vmatprep.mubr.f32.mxu0 0.0
    %201 = vmatmul.mubr.f32.gmra.mrb[0].mxu0 %v83
    %v202 = vpop.f32.mrb[0].mxu0
    %v203 = vadd.f32 0.0, %v202
    %v204 = vpop.f32.mrb[0].mxu0
    %205 = vmatprep.mubr.f32.mxu0 0.0
    %206 = vmatmul.mubr.f32.gmra.mrb[0].mxu0 %v86
    %v207 = vpop.f32.mrb[0].mxu0
    %v208 = vadd.f32 0.0, %v207
    %v209 = vpop.f32.mrb[0].mxu0
    %210 = vmatprep.mubr.f32.mxu0 0.0
    %211 = vmatmul.mubr.f32.gmra.mrb[0].mxu0 %v89
    %v212 = vpop.f32.mrb[0].mxu0
    %v213 = vadd.f32 0.0, %v212
    %v214 = vpop.f32.mrb[0].mxu0
    %215 = vmatprep.mubr.f32.mxu0 0.0
    %216 = vmatmul.mubr.f32.gmra.mrb[0].mxu0 %v92
    %v217 = vpop.f32.mrb[0].mxu0
    %v218 = vadd.f32 0.0, %v217
    %v219 = vpop.f32.mrb[0].mxu0
    %220 = vmatprep.mubr.f32.mxu0 0.0
    %221 = vmatmul.mubr.f32.gmra.mrb[0].mxu0 %v95
    %v222 = vpop.f32.mrb[0].mxu0
    %v223 = vadd.f32 0.0, %v222
    %v224 = vpop.f32.mrb[0].mxu0
    %225 = vmatprep.mubr.f32.mxu0 0.0
    %226 = vmatmul.mubr.f32.gmra.mrb[0].mxu0 %v98
    %v227 = vpop.f32.mrb[0].mxu0
    %v228 = vadd.f32 0.0, %v227
    %v229 = vpop.f32.mrb[0].mxu0
    %230 = vmatprep.mubr.f32.mxu0 0.0
    %231 = vmatmul.mubr.f32.gmra.mrb[0].mxu0 %v101
    %v232 = vpop.f32.mrb[0].mxu0
    %v233 = vadd.f32 0.0, %v232
    %v234 = vpop.f32.mrb[0].mxu0
    %235 = vmatprep.mubr.f32.mxu0 0.0
    %236 = vmatmul.mubr.f32.gmra.mrb[0].mxu0 %v104
    %v237 = vpop.f32.mrb[0].mxu0
    %v238 = vadd.f32 0.0, %v237
    %v239 = vpop.f32.mrb[0].mxu0
    %240 = vmatprep.mubr.f32.mxu0 0.0
    %241 = vmatmul.mubr.f32.gmra.mrb[0].mxu0 %v107
    %v242 = vpop.f32.mrb[0].mxu0
    %v243 = vadd.f32 0.0, %v242
    %v244 = vpop.f32.mrb[0].mxu0
    %245 = vmatprep.mubr.f32.mxu0 0.0
    %246 = vmatmul.mubr.f32.gmra.mrb[0].mxu0 %v110
    %v247 = vpop.f32.mrb[0].mxu0
    %v248 = vadd.f32 0.0, %v247
    %v249 = vpop.f32.mrb[0].mxu0
    %250 = vmatprep.mubr.f32.mxu0 0.0
    %251 = vmatmul.mubr.f32.gmra.mrb[0].mxu0 %v113
    %v252 = vpop.f32.mrb[0].mxu0
    %v253 = vadd.f32 0.0, %v252
    %v254 = vpop.f32.mrb[0].mxu0
    %255 = vmatprep.mubr.f32.mxu0 0.0
    %256 = vmatmul.mubr.f32.gmra.mrb[0].mxu0 %v116
    %v257 = vpop.f32.mrb[0].mxu0
    %v258 = vadd.f32 0.0, %v257
    %v259 = vpop.f32.mrb[0].mxu0
    %260 = vmatprep.mubr.f32.mxu0 0.0
    %261 = vmatmul.mubr.f32.gmra.mrb[0].mxu0 %v119
    %v262 = vpop.f32.mrb[0].mxu0
    %v263 = vadd.f32 0.0, %v262
    %v264 = vpop.f32.mrb[0].mxu0
    %265 = vdwg.mxu0
    %v266 = vld [vmem:[%s2] sm:$0x1]
    %v268 = vlaneseq
    %v269 = vshrl.u32 %v268, 7
    %v270 = vsub.s32 0, %v269
    %v271 = vrot.slane %v266, %v270
    %v273 = vsub.f32 %v188, %v271
    %v274 = vsub.f32 %v193, %v271
    %v275 = vsub.f32 %v198, %v271
    %v276 = vsub.f32 %v203, %v271
    %v277 = vsub.f32 %v208, %v271
    %v278 = vsub.f32 %v213, %v271
    %v279 = vsub.f32 %v218, %v271
    %v280 = vsub.f32 %v223, %v271
    %v281 = vsub.f32 %v228, %v271
    %v282 = vsub.f32 %v233, %v271
    %v283 = vsub.f32 %v238, %v271
    %v284 = vsub.f32 %v243, %v271
    %v285 = vsub.f32 %v248, %v271
    %v286 = vsub.f32 %v253, %v271
    %v287 = vsub.f32 %v258, %v271
    %v288 = vsub.f32 %v263, %v271
    %289 = vmax.xlane.f32.xlu0 %v273
    %v290 = vpop.xlane.xlu0 %289
    %291 = vmax.xlane.f32.xlu0 %v274
    %v292 = vpop.xlane.xlu0 %291
    %293 = vmax.xlane.f32.xlu0 %v275
    %v294 = vpop.xlane.xlu0 %293
    %295 = vmax.xlane.f32.xlu0 %v276
    %v296 = vpop.xlane.xlu0 %295
    %297 = vmax.xlane.f32.xlu0 %v277
    %v298 = vpop.xlane.xlu0 %297
    %299 = vmax.xlane.f32.xlu0 %v278
    %v300 = vpop.xlane.xlu0 %299
    %301 = vmax.xlane.f32.xlu0 %v279
    %v302 = vpop.xlane.xlu0 %301
    %303 = vmax.xlane.f32.xlu0 %v280
    %v304 = vpop.xlane.xlu0 %303
    %305 = vmax.xlane.f32.xlu0 %v281
    %v306 = vpop.xlane.xlu0 %305
    %307 = vmax.xlane.f32.xlu0 %v282
    %v308 = vpop.xlane.xlu0 %307
    %309 = vmax.xlane.f32.xlu0 %v283
    %v310 = vpop.xlane.xlu0 %309
    %311 = vmax.xlane.f32.xlu0 %v284
    %v312 = vpop.xlane.xlu0 %311
    %313 = vmax.xlane.f32.xlu0 %v285
    %v314 = vpop.xlane.xlu0 %313
    %315 = vmax.xlane.f32.xlu0 %v286
    %v316 = vpop.xlane.xlu0 %315
    %317 = vmax.xlane.f32.xlu0 %v287
    %v318 = vpop.xlane.xlu0 %317
    %319 = vmax.xlane.f32.xlu0 %v288
    %v320 = vpop.xlane.xlu0 %319
    %321 = vmax.index.xlane.f32.xlu0 %v273
    %v322 = vpop.xlane.xlu0 %321
    %323 = vmax.index.xlane.f32.xlu0 %v274
    %v324 = vpop.xlane.xlu0 %323
    %325 = vmax.index.xlane.f32.xlu0 %v275
    %v326 = vpop.xlane.xlu0 %325
    %327 = vmax.index.xlane.f32.xlu0 %v276
    %v328 = vpop.xlane.xlu0 %327
    %329 = vmax.index.xlane.f32.xlu0 %v277
    %v330 = vpop.xlane.xlu0 %329
    %331 = vmax.index.xlane.f32.xlu0 %v278
    %v332 = vpop.xlane.xlu0 %331
    %333 = vmax.index.xlane.f32.xlu0 %v279
    %v334 = vpop.xlane.xlu0 %333
    %335 = vmax.index.xlane.f32.xlu0 %v280
    %v336 = vpop.xlane.xlu0 %335
    %337 = vmax.index.xlane.f32.xlu0 %v281
    %v338 = vpop.xlane.xlu0 %337
    %339 = vmax.index.xlane.f32.xlu0 %v282
    %v340 = vpop.xlane.xlu0 %339
    %341 = vmax.index.xlane.f32.xlu0 %v283
    %v342 = vpop.xlane.xlu0 %341
    %343 = vmax.index.xlane.f32.xlu0 %v284
    %v344 = vpop.xlane.xlu0 %343
    %345 = vmax.index.xlane.f32.xlu0 %v285
    %v346 = vpop.xlane.xlu0 %345
    %347 = vmax.index.xlane.f32.xlu0 %v286
    %v348 = vpop.xlane.xlu0 %347
    %349 = vmax.index.xlane.f32.xlu0 %v287
    %v350 = vpop.xlane.xlu0 %349
    %351 = vmax.index.xlane.f32.xlu0 %v288
    %v352 = vpop.xlane.xlu0 %351
    %s353 = smul.u32 0, 128
    %v354 = vstv %s353
    %v355 = vadd.s32 %v322, %v354
    %v356 = vadd.s32 %v324, %v354
    %v357 = vadd.s32 %v326, %v354
    %v358 = vadd.s32 %v328, %v354
    %v359 = vadd.s32 %v330, %v354
    %v360 = vadd.s32 %v332, %v354
    %v361 = vadd.s32 %v334, %v354
    %v362 = vadd.s32 %v336, %v354
    %v363 = vadd.s32 %v338, %v354
    %v364 = vadd.s32 %v340, %v354
    %v365 = vadd.s32 %v342, %v354
    %v366 = vadd.s32 %v344, %v354
    %v367 = vadd.s32 %v346, %v354
    %v368 = vadd.s32 %v348, %v354
    %v369 = vadd.s32 %v350, %v354
    %v370 = vadd.s32 %v352, %v354
    %v371 = vld [vmem:[#allocation2] sm:$0xff]
    %v372 = vld [vmem:[#allocation2 + $0x8] sm:$0xff]
    %v373 = vld [vmem:[#allocation2 + $0x10] sm:$0xff]
    %v374 = vld [vmem:[#allocation2 + $0x18] sm:$0xff]
    %v375 = vld [vmem:[#allocation2 + $0x20] sm:$0xff]
    %v376 = vld [vmem:[#allocation2 + $0x28] sm:$0xff]
    %v377 = vld [vmem:[#allocation2 + $0x30] sm:$0xff]
    %v378 = vld [vmem:[#allocation2 + $0x38] sm:$0xff]
    %v379 = vld [vmem:[#allocation2 + $0x40] sm:$0xff]
    %v380 = vld [vmem:[#allocation2 + $0x48] sm:$0xff]
    %v381 = vld [vmem:[#allocation2 + $0x50] sm:$0xff]
    %v382 = vld [vmem:[#allocation2 + $0x58] sm:$0xff]
    %v383 = vld [vmem:[#allocation2 + $0x60] sm:$0xff]
    %v384 = vld [vmem:[#allocation2 + $0x68] sm:$0xff]
    %v385 = vld [vmem:[#allocation2 + $0x70] sm:$0xff]
    %v386 = vld [vmem:[#allocation2 + $0x78] sm:$0xff]
    %vm387 = vcmp.gt.f32.partialorder %v290, %v371
    %vm388 = vcmp.gt.f32.partialorder %v292, %v372
    %vm389 = vcmp.gt.f32.partialorder %v294, %v373
    %vm390 = vcmp.gt.f32.partialorder %v296, %v374
    %vm391 = vcmp.gt.f32.partialorder %v298, %v375
    %vm392 = vcmp.gt.f32.partialorder %v300, %v376
    %vm393 = vcmp.gt.f32.partialorder %v302, %v377
    %vm394 = vcmp.gt.f32.partialorder %v304, %v378
    %vm395 = vcmp.gt.f32.partialorder %v306, %v379
    %vm396 = vcmp.gt.f32.partialorder %v308, %v380
    %vm397 = vcmp.gt.f32.partialorder %v310, %v381
    %vm398 = vcmp.gt.f32.partialorder %v312, %v382
    %vm399 = vcmp.gt.f32.partialorder %v314, %v383
    %vm400 = vcmp.gt.f32.partialorder %v316, %v384
    %vm401 = vcmp.gt.f32.partialorder %v318, %v385
    %vm402 = vcmp.gt.f32.partialorder %v320, %v386
    %v403 = vld [vmem:[#allocation3] sm:$0xff]
    %v404 = vld [vmem:[#allocation3 + $0x8] sm:$0xff]
    %v405 = vld [vmem:[#allocation3 + $0x10] sm:$0xff]
    %v406 = vld [vmem:[#allocation3 + $0x18] sm:$0xff]
    %v407 = vld [vmem:[#allocation3 + $0x20] sm:$0xff]
    %v408 = vld [vmem:[#allocation3 + $0x28] sm:$0xff]
    %v409 = vld [vmem:[#allocation3 + $0x30] sm:$0xff]
    %v410 = vld [vmem:[#allocation3 + $0x38] sm:$0xff]
    %v411 = vld [vmem:[#allocation3 + $0x40] sm:$0xff]
    %v412 = vld [vmem:[#allocation3 + $0x48] sm:$0xff]
    %v413 = vld [vmem:[#allocation3 + $0x50] sm:$0xff]
    %v414 = vld [vmem:[#allocation3 + $0x58] sm:$0xff]
    %v415 = vld [vmem:[#allocation3 + $0x60] sm:$0xff]
    %v416 = vld [vmem:[#allocation3 + $0x68] sm:$0xff]
    %v417 = vld [vmem:[#allocation3 + $0x70] sm:$0xff]
    %v418 = vld [vmem:[#allocation3 + $0x78] sm:$0xff]
    %v419 = vsel %vm387, %v355, %v403
    %v420 = vsel %vm388, %v356, %v404
    %v421 = vsel %vm389, %v357, %v405
    %v422 = vsel %vm390, %v358, %v406
    %v423 = vsel %vm391, %v359, %v407
    %v424 = vsel %vm392, %v360, %v408
    %v425 = vsel %vm393, %v361, %v409
    %v426 = vsel %vm394, %v362, %v410
    %v427 = vsel %vm395, %v363, %v411
    %v428 = vsel %vm396, %v364, %v412
    %v429 = vsel %vm397, %v365, %v413
    %v430 = vsel %vm398, %v366, %v414
    %v431 = vsel %vm399, %v367, %v415
    %v432 = vsel %vm400, %v368, %v416
    %v433 = vsel %vm401, %v369, %v417
    %v434 = vsel %vm402, %v370, %v418
    %vm435 = vcmask 7168
    %436 = vst.msk [vmem:[#allocation3] sm:$0xff] %vm435, %v419
    %437 = vst.msk [vmem:[#allocation3 + $0x8] sm:$0xff] %vm435, %v420
    %438 = vst.msk [vmem:[#allocation3 + $0x10] sm:$0xff] %vm435, %v421
    %439 = vst.msk [vmem:[#allocation3 + $0x18] sm:$0xff] %vm435, %v422
    %440 = vst.msk [vmem:[#allocation3 + $0x20] sm:$0xff] %vm435, %v423
    %441 = vst.msk [vmem:[#allocation3 + $0x28] sm:$0xff] %vm435, %v424
    %442 = vst.msk [vmem:[#allocation3 + $0x30] sm:$0xff] %vm435, %v425
    %443 = vst.msk [vmem:[#allocation3 + $0x38] sm:$0xff] %vm435, %v426
    %444 = vst.msk [vmem:[#allocation3 + $0x40] sm:$0xff] %vm435, %v427
    %445 = vst.msk [vmem:[#allocation3 + $0x48] sm:$0xff] %vm435, %v428
    %446 = vst.msk [vmem:[#allocation3 + $0x50] sm:$0xff] %vm435, %v429
    %447 = vst.msk [vmem:[#allocation3 + $0x58] sm:$0xff] %vm435, %v430
    %448 = vst.msk [vmem:[#allocation3 + $0x60] sm:$0xff] %vm435, %v431
    %449 = vst.msk [vmem:[#allocation3 + $0x68] sm:$0xff] %vm435, %v432
    %450 = vst.msk [vmem:[#allocation3 + $0x70] sm:$0xff] %vm435, %v433
    %451 = vst.msk [vmem:[#allocation3 + $0x78] sm:$0xff] %vm435, %v434
    %v452 = vld [vmem:[#allocation2] sm:$0xff]
    %v453 = vld [vmem:[#allocation2 + $0x8] sm:$0xff]
    %v454 = vld [vmem:[#allocation2 + $0x10] sm:$0xff]
    %v455 = vld [vmem:[#allocation2 + $0x18] sm:$0xff]
    %v456 = vld [vmem:[#allocation2 + $0x20] sm:$0xff]
    %v457 = vld [vmem:[#allocation2 + $0x28] sm:$0xff]
    %v458 = vld [vmem:[#allocation2 + $0x30] sm:$0xff]
    %v459 = vld [vmem:[#allocation2 + $0x38] sm:$0xff]
    %v460 = vld [vmem:[#allocation2 + $0x40] sm:$0xff]
    %v461 = vld [vmem:[#allocation2 + $0x48] sm:$0xff]
    %v462 = vld [vmem:[#allocation2 + $0x50] sm:$0xff]
    %v463 = vld [vmem:[#allocation2 + $0x58] sm:$0xff]
    %v464 = vld [vmem:[#allocation2 + $0x60] sm:$0xff]
    %v465 = vld [vmem:[#allocation2 + $0x68] sm:$0xff]
    %v466 = vld [vmem:[#allocation2 + $0x70] sm:$0xff]
    %v467 = vld [vmem:[#allocation2 + $0x78] sm:$0xff]
    %v468 = vsel %vm387, %v290, %v452
    %v469 = vsel %vm388, %v292, %v453
    %v470 = vsel %vm389, %v294, %v454
    %v471 = vsel %vm390, %v296, %v455
    %v472 = vsel %vm391, %v298, %v456
    %v473 = vsel %vm392, %v300, %v457
    %v474 = vsel %vm393, %v302, %v458
    %v475 = vsel %vm394, %v304, %v459
    %v476 = vsel %vm395, %v306, %v460
    %v477 = vsel %vm396, %v308, %v461
    %v478 = vsel %vm397, %v310, %v462
    %v479 = vsel %vm398, %v312, %v463
    %v480 = vsel %vm399, %v314, %v464
    %v481 = vsel %vm400, %v316, %v465
    %v482 = vsel %vm401, %v318, %v466
    %v483 = vsel %vm402, %v320, %v467
    %484 = vst.msk [vmem:[#allocation2] sm:$0xff] %vm435, %v468
    %485 = vst.msk [vmem:[#allocation2 + $0x8] sm:$0xff] %vm435, %v469
    %486 = vst.msk [vmem:[#allocation2 + $0x10] sm:$0xff] %vm435, %v470
    %487 = vst.msk [vmem:[#allocation2 + $0x18] sm:$0xff] %vm435, %v471
    %488 = vst.msk [vmem:[#allocation2 + $0x20] sm:$0xff] %vm435, %v472
    %489 = vst.msk [vmem:[#allocation2 + $0x28] sm:$0xff] %vm435, %v473
    %490 = vst.msk [vmem:[#allocation2 + $0x30] sm:$0xff] %vm435, %v474
    %491 = vst.msk [vmem:[#allocation2 + $0x38] sm:$0xff] %vm435, %v475
    %492 = vst.msk [vmem:[#allocation2 + $0x40] sm:$0xff] %vm435, %v476
    %493 = vst.msk [vmem:[#allocation2 + $0x48] sm:$0xff] %vm435, %v477
    %494 = vst.msk [vmem:[#allocation2 + $0x50] sm:$0xff] %vm435, %v478
    %495 = vst.msk [vmem:[#allocation2 + $0x58] sm:$0xff] %vm435, %v479
    %496 = vst.msk [vmem:[#allocation2 + $0x60] sm:$0xff] %vm435, %v480
    %497 = vst.msk [vmem:[#allocation2 + $0x68] sm:$0xff] %vm435, %v481
    %498 = vst.msk [vmem:[#allocation2 + $0x70] sm:$0xff] %vm435, %v482
    %499 = vst.msk [vmem:[#allocation2 + $0x78] sm:$0xff] %vm435, %v483
    // Predicated region
    $region18: #{tpu_custom_call.1} parent=1 // pred_check
      %p500 = pneg %p15
    $region19: #{tpu_custom_call.1} parent=1 // pred_check_branch
      %502 = sbr.rel (%p500) target = $region21
    $region20: #{tpu_custom_call.1} parent=1 // pred_region
      %v503 = vld [vmem:[#allocation3] sm:$0xff]
      %v504 = vld [vmem:[#allocation3 + $0x8] sm:$0xff]
      %v505 = vld [vmem:[#allocation3 + $0x10] sm:$0xff]
      %v506 = vld [vmem:[#allocation3 + $0x18] sm:$0xff]
      %v507 = vld [vmem:[#allocation3 + $0x20] sm:$0xff]
      %v508 = vld [vmem:[#allocation3 + $0x28] sm:$0xff]
      %v509 = vld [vmem:[#allocation3 + $0x30] sm:$0xff]
      %v510 = vld [vmem:[#allocation3 + $0x38] sm:$0xff]
      %v511 = vld [vmem:[#allocation3 + $0x40] sm:$0xff]
      %v512 = vld [vmem:[#allocation3 + $0x48] sm:$0xff]
      %v513 = vld [vmem:[#allocation3 + $0x50] sm:$0xff]
      %v514 = vld [vmem:[#allocation3 + $0x58] sm:$0xff]
      %v515 = vld [vmem:[#allocation3 + $0x60] sm:$0xff]
      %v516 = vld [vmem:[#allocation3 + $0x68] sm:$0xff]
      %v517 = vld [vmem:[#allocation3 + $0x70] sm:$0xff]
      %v518 = vld [vmem:[#allocation3 + $0x78] sm:$0xff]
      %519 = vset.pattern.permute.xlu0 0
      %520 = vperm.xlu0 %519, %v503
      %v521 = vpop.permute.xlu0 %520
      %522 = vset.pattern.permute.xlu0 0
      %523 = vperm.xlu0 %522, %v504
      %v524 = vpop.permute.xlu0 %523
      %525 = vset.pattern.permute.xlu0 0
      %526 = vperm.xlu0 %525, %v505
      %v527 = vpop.permute.xlu0 %526
      %528 = vset.pattern.permute.xlu0 0
      %529 = vperm.xlu0 %528, %v506
      %v530 = vpop.permute.xlu0 %529
      %531 = vset.pattern.permute.xlu0 0
      %532 = vperm.xlu0 %531, %v507
      %v533 = vpop.permute.xlu0 %532
      %534 = vset.pattern.permute.xlu0 0
      %535 = vperm.xlu0 %534, %v508
      %v536 = vpop.permute.xlu0 %535
      %537 = vset.pattern.permute.xlu0 0
      %538 = vperm.xlu0 %537, %v509
      %v539 = vpop.permute.xlu0 %538
      %540 = vset.pattern.permute.xlu0 0
      %541 = vperm.xlu0 %540, %v510
      %v542 = vpop.permute.xlu0 %541
      %543 = vset.pattern.permute.xlu0 0
      %544 = vperm.xlu0 %543, %v511
      %v545 = vpop.permute.xlu0 %544
      %546 = vset.pattern.permute.xlu0 0
      %547 = vperm.xlu0 %546, %v512
      %v548 = vpop.permute.xlu0 %547
      %549 = vset.pattern.permute.xlu0 0
      %550 = vperm.xlu0 %549, %v513
      %v551 = vpop.permute.xlu0 %550
      %552 = vset.pattern.permute.xlu0 0
      %553 = vperm.xlu0 %552, %v514
      %v554 = vpop.permute.xlu0 %553
      %555 = vset.pattern.permute.xlu0 0
      %556 = vperm.xlu0 %555, %v515
      %v557 = vpop.permute.xlu0 %556
      %558 = vset.pattern.permute.xlu0 0
      %559 = vperm.xlu0 %558, %v516
      %v560 = vpop.permute.xlu0 %559
      %561 = vset.pattern.permute.xlu0 0
      %562 = vperm.xlu0 %561, %v517
      %v563 = vpop.permute.xlu0 %562
      %564 = vset.pattern.permute.xlu0 0
      %565 = vperm.xlu0 %564, %v518
      %v566 = vpop.permute.xlu0 %565
      %v567 = vlaneseq
      %v568 = vand.u32 %v567, 127
      %v569 = vlaneseq
      %v570 = vshrl.u32 %v569, 7
      %v571 = vsub.s32 %v568, %v570
      %v572 = vrot.slane %v521, %v571
      %v573 = vadd.s32 %v568, 4294967288
      %v574 = vlaneseq
      %v575 = vshrl.u32 %v574, 7
      %v576 = vsub.s32 %v573, %v575
      %v577 = vrot.slane %v524, %v576
      %vm578 = vcmask 130112
      %v579 = vsel %vm578, %v577, %v572
      %v580 = vadd.s32 %v568, 4294967280
      %v581 = vlaneseq
      %v582 = vshrl.u32 %v581, 7
      %v583 = vsub.s32 %v580, %v582
      %v584 = vrot.slane %v527, %v583
      %vm585 = vcmask 195712
      %v586 = vsel %vm585, %v584, %v579
      %v587 = vadd.s32 %v568, 4294967272
      %v588 = vlaneseq
      %v589 = vshrl.u32 %v588, 7
      %v590 = vsub.s32 %v587, %v589
      %v591 = vrot.slane %v530, %v590
      %vm592 = vcmask 261312
      %v593 = vsel %vm592, %v591, %v586
      %v594 = vadd.s32 %v568, 4294967264
      %v595 = vlaneseq
      %v596 = vshrl.u32 %v595, 7
      %v597 = vsub.s32 %v594, %v596
      %v598 = vrot.slane %v533, %v597
      %vm599 = vcmask 326912
      %v600 = vsel %vm599, %v598, %v593
      %v601 = vadd.s32 %v568, 4294967256
      %v602 = vlaneseq
      %v603 = vshrl.u32 %v602, 7
      %v604 = vsub.s32 %v601, %v603
      %v605 = vrot.slane %v536, %v604
      %vm606 = vcmask 392512
      %v607 = vsel %vm606, %v605, %v600
      %v608 = vadd.s32 %v568, 4294967248
      %v609 = vlaneseq
      %v610 = vshrl.u32 %v609, 7
      %v611 = vsub.s32 %v608, %v610
      %v612 = vrot.slane %v539, %v611
      %vm613 = vcmask 458112
      %v614 = vsel %vm613, %v612, %v607
      %v615 = vadd.s32 %v568, 4294967240
      %v616 = vlaneseq
      %v617 = vshrl.u32 %v616, 7
      %v618 = vsub.s32 %v615, %v617
      %v619 = vrot.slane %v542, %v618
      %vm620 = vcmask 523712
      %v621 = vsel %vm620, %v619, %v614
      %v622 = vadd.s32 %v568, 4294967232
      %v623 = vlaneseq
      %v624 = vshrl.u32 %v623, 7
      %v625 = vsub.s32 %v622, %v624
      %v626 = vrot.slane %v545, %v625
      %vm627 = vcmask 589312
      %v628 = vsel %vm627, %v626, %v621
      %v629 = vadd.s32 %v568, 4294967224
      %v630 = vlaneseq
      %v631 = vshrl.u32 %v630, 7
      %v632 = vsub.s32 %v629, %v631
      %v633 = vrot.slane %v548, %v632
      %vm634 = vcmask 654912
      %v635 = vsel %vm634, %v633, %v628
      %v636 = vadd.s32 %v568, 4294967216
      %v637 = vlaneseq
      %v638 = vshrl.u32 %v637, 7
      %v639 = vsub.s32 %v636, %v638
      %v640 = vrot.slane %v551, %v639
      %vm641 = vcmask 720512
      %v642 = vsel %vm641, %v640, %v635
      %v643 = vadd.s32 %v568, 4294967208
      %v644 = vlaneseq
      %v645 = vshrl.u32 %v644, 7
      %v646 = vsub.s32 %v643, %v645
      %v647 = vrot.slane %v554, %v646
      %vm648 = vcmask 786112
      %v649 = vsel %vm648, %v647, %v642
      %v650 = vadd.s32 %v568, 4294967200
      %v651 = vlaneseq
      %v652 = vshrl.u32 %v651, 7
      %v653 = vsub.s32 %v650, %v652
      %v654 = vrot.slane %v557, %v653
      %vm655 = vcmask 851712
      %v656 = vsel %vm655, %v654, %v649
      %v657 = vadd.s32 %v568, 4294967192
      %v658 = vlaneseq
      %v659 = vshrl.u32 %v658, 7
      %v660 = vsub.s32 %v657, %v659
      %v661 = vrot.slane %v560, %v660
      %vm662 = vcmask 917312
      %v663 = vsel %vm662, %v661, %v656
      %v664 = vadd.s32 %v568, 4294967184
      %v665 = vlaneseq
      %v666 = vshrl.u32 %v665, 7
      %v667 = vsub.s32 %v664, %v666
      %v668 = vrot.slane %v563, %v667
      %vm669 = vcmask 982912
      %v670 = vsel %vm669, %v668, %v663
      %v671 = vadd.s32 %v568, 4294967176
      %v672 = vlaneseq
      %v673 = vshrl.u32 %v672, 7
      %v674 = vsub.s32 %v671, %v673
      %v675 = vrot.slane %v566, %v674
      %vm676 = vcmask 1048512
      %v677 = vsel %vm676, %v675, %v670
      %678 = vst [vmem:[#allocation4] sm:$0x1] %v677
    $region21: #{tpu_custom_call.1} parent=1 // pred_fallthru
      _
    // Predicated region
    $region22: #{tpu_custom_call.1} parent=1 // pred_check
      _
    $region23: #{tpu_custom_call.1} parent=1 // pred_check_branch
      %680 = sbr.rel (0) target = $region25
    $region24: #{tpu_custom_call.1} parent=1 // pred_region
      %s682 = ssub.s32 16, 16
      %683 = vsyncadd [#allocation5], %s682
      %s685 = sshll.u32 [#allocation4], 4
      %s686 = int_to_ptr.vmem [resolvable:$true] %s685
      %688 = dma.vmem_to_hbm [thread:$0]  %s686, 16, %s3, [#allocation5]
    $region25: #{tpu_custom_call.1} parent=1 // pred_fallthru
      _
    // Predicated region
    $region26: #{tpu_custom_call.1} parent=1 // pred_check
      _
    $region27: #{tpu_custom_call.1} parent=1 // pred_check_branch
      %690 = sbr.rel (0) target = $region29
    $region28: #{tpu_custom_call.1} parent=1 // pred_region
      %691 = dma.done [#allocation5], 16
    $region29: #{tpu_custom_call.1} parent=1 // pred_fallthru
      _
    %692 = vsyncpa [#allocation5], 1

</llo_original>
